<compile_context>
chip_gen: v7x
topology: tpu7x:2x2x1
jax: 0.10.0
libtpu: 0.0.40
codegen_flags: <defaults>
</compile_context>

<pallas_src>
import jax
import jax.numpy as jnp
from jax.experimental import pallas as pl
from jax.experimental.pallas import tpu as pltpu


_VMEM_BLOCK_BUDGET = 12 * 1024 * 1024   # double-buffered block working set target
_MAX_SEQ_TILE = 2048                    # ~2 MB/step @ dim=256 bf16; past the overhead knee
_MIN_GRID_STEPS = 4                     # >= 2 steps per TensorCore on v7x megacore


def _rope_kernel(pos_ref, invf_ref, cos_ref, sin_ref):
    # pos_ref : (1, TS, 1)   float32  positions for this (batch, seq-tile)
    # invf_ref: (1, 1, half) float32  inverse frequencies (resident across steps)
    # cos_ref / sin_ref : (1, TS, dim)  x.dtype
    half = invf_ref.shape[-1]
    freqs = pos_ref[...] * invf_ref[...]            # (1, TS, half), f32
    c = jnp.cos(freqs).astype(cos_ref.dtype)        # half-width transcendentals
    s = jnp.sin(freqs).astype(sin_ref.dtype)
    # HF layout: emb = concat([freqs, freqs], -1).
    if half % 128 == 0:
        # Lane-aligned halves (Gemma head_dim=256): two full-lane vst per output.
        cos_ref[:, :, :half] = c
        cos_ref[:, :, half:] = c
        sin_ref[:, :, :half] = s
        sin_ref[:, :, half:] = s
    else:
        # Small head_dim: one lane-dense store per output instead of two masked
        # stores at non-lane-aligned offsets; concat rides the idle XLU slot.
        cos_ref[...] = jnp.concatenate([c, c], axis=-1)
        sin_ref[...] = jnp.concatenate([s, s], axis=-1)


def _choose_seq_tile(seq, bs, dim, out_itemsize, max_seq_tile=None):
    """Largest 8-aligned seq tile whose double-buffered blocks fit the budget."""
    # Per-row bytes of pipelined block state:
    #   2 outputs x 2 buffers x dim x itemsize
    # + 2 buffers x 128 lanes x 4B   (the (ts, 1) f32 positions block pads to (ts, 128))
    bytes_per_row = 2 * 2 * dim * out_itemsize + 2 * 128 * 4
    cap = _VMEM_BLOCK_BUDGET // bytes_per_row
    cap = min(cap, _MAX_SEQ_TILE)
    if max_seq_tile is not None:
        cap = min(cap, max_seq_tile)
    cap = max(cap, 8)

    ts = seq if seq <= cap else (cap // 8) * 8

    # Keep enough grid steps so both v7x cores can overlap DMA with compute.
    while ts > 8 and bs * ((seq + ts - 1) // ts) < _MIN_GRID_STEPS:
        ts = max(8, ((ts // 2) // 8) * 8)
    return ts


def gemma_rotary_embedding(x, position_ids, dim, base=10000.0, max_seq_tile=None):
    """Pallas implementation of GemmaRotaryEmbedding.forward.

    x:            (bs, n_heads, seq, head_dim)  -- only dtype matters
    position_ids: (bs, seq) int
    returns:      cos, sin of shape (bs, seq, dim) in x.dtype
    """
    assert dim % 2 == 0, "rotary dim must be even"
    bs, seq = position_ids.shape
    half = dim // 2
    out_dtype = x.dtype
    out_itemsize = jnp.dtype(out_dtype).itemsize

    ts = _choose_seq_tile(seq, bs, dim, out_itemsize, max_seq_tile)
    n_seq_tiles = pl.cdiv(seq, ts)   # edge blocks handled by Pallas masking

    # Parameter setup (matches: 1 / base**(arange(0, dim, 2)/dim)) -- JAX glue.
    # Note: f32 positions are exact for position_ids < 2^24 (fine for Gemma).
    inv_freq = 1.0 / (base ** (jnp.arange(0, dim, 2, dtype=jnp.float32) / dim))
    pos_f32 = position_ids.astype(jnp.float32).reshape(bs, seq, 1)
    invf = inv_freq.reshape(1, 1, half)

    out_sds = jax.ShapeDtypeStruct((bs, seq, dim), out_dtype)

    cost = pl.CostEstimate(
        flops=bs * seq * half,                 # pos * inv_freq
        transcendentals=bs * seq * dim,        # half-width cos + sin
        bytes_accessed=2 * bs * seq * dim * out_itemsize + bs * seq * 4 + half * 4,
    )

    cos, sin = pl.pallas_call(
        _rope_kernel,
        out_shape=(out_sds, out_sds),
        grid=(bs, n_seq_tiles),
        in_specs=[
            pl.BlockSpec((1, ts, 1), lambda b, s: (b, s, 0)),
            pl.BlockSpec((1, 1, half), lambda b, s: (0, 0, 0)),  # stays resident
        ],
        out_specs=(
            pl.BlockSpec((1, ts, dim), lambda b, s: (b, s, 0)),
            pl.BlockSpec((1, ts, dim), lambda b, s: (b, s, 0)),
        ),
        compiler_params=pltpu.CompilerParams(
            dimension_semantics=("parallel", "parallel"),
            vmem_limit_bytes=32 * 1024 * 1024,
        ),
        cost_estimate=cost,
    )(pos_f32, invf)
    return cos, sin


def _reference(x, position_ids, dim, base=10000.0):
    inv_freq = 1.0 / (base ** (jnp.arange(0, dim, 2, dtype=jnp.float32) / dim))
    freqs = position_ids.astype(jnp.float32)[:, :, None] * inv_freq[None, None, :]
    emb = jnp.concatenate([freqs, freqs], axis=-1)
    return jnp.cos(emb).astype(x.dtype), jnp.sin(emb).astype(x.dtype)


if __name__ == "__main__":
    key = jax.random.PRNGKey(0)
    kx, kp = jax.random.split(key)

    # --- 1) small Gemma-like shape (lane-dense small-dim store path) ---
    bs, n_heads, seq, head_dim = 2, 4, 8, 32
    x = jax.random.normal(kx, (bs, n_heads, seq, head_dim), dtype=jnp.float32)
    position_ids = jnp.broadcast_to(
        jnp.arange(seq, dtype=jnp.int32)[None, :], (bs, seq))

    cos, sin = gemma_rotary_embedding(x, position_ids, dim=head_dim)
    jax.block_until_ready((cos, sin))

    cos_ref, sin_ref = _reference(x, position_ids, dim=head_dim)
    assert cos.shape == (bs, seq, head_dim) and sin.shape == (bs, seq, head_dim)
    assert cos.dtype == x.dtype and sin.dtype == x.dtype
    assert jnp.allclose(cos, cos_ref, atol=1e-5, rtol=1e-5)
    assert jnp.allclose(sin, sin_ref, atol=1e-5, rtol=1e-5)

    # --- 2) seq tiling (grid=(2,4)), non-contiguous positions, bf16 out ---
    bs2, seq2, dim2 = 2, 1024, 64
    x2 = jax.random.normal(kx, (bs2, 1, seq2, dim2), dtype=jnp.bfloat16)
    position_ids2 = jax.random.randint(kp, (bs2, seq2), 0, 4096, dtype=jnp.int32)

    cos2, sin2 = gemma_rotary_embedding(x2, position_ids2, dim=dim2,
                                        max_seq_tile=256)
    jax.block_until_ready((cos2, sin2))

    cos2_ref, sin2_ref = _reference(x2, position_ids2, dim=dim2)
    assert cos2.shape == (bs2, seq2, dim2) and cos2.dtype == jnp.bfloat16
    assert jnp.allclose(cos2.astype(jnp.float32), cos2_ref.astype(jnp.float32),
                        atol=2e-2, rtol=2e-2)
    assert jnp.allclose(sin2.astype(jnp.float32), sin2_ref.astype(jnp.float32),
                        atol=2e-2, rtol=2e-2)

    # --- 3) non-divisible seq exercises the cdiv grid / masked edge block ---
    bs3, seq3, dim3 = 2, 1000, 32
    x3 = jax.random.normal(kx, (bs3, 1, seq3, dim3), dtype=jnp.float32)
    position_ids3 = jax.random.randint(kp, (bs3, seq3), 0, 4096, dtype=jnp.int32)

    cos3, sin3 = gemma_rotary_embedding(x3, position_ids3, dim=dim3)
    jax.block_until_ready((cos3, sin3))

    cos3_ref, sin3_ref = _reference(x3, position_ids3, dim=dim3)
    assert cos3.shape == (bs3, seq3, dim3) and cos3.dtype == jnp.float32
    assert jnp.allclose(cos3, cos3_ref, atol=1e-5, rtol=1e-5)
    assert jnp.allclose(sin3, sin3_ref, atol=1e-5, rtol=1e-5)

    print("KERNEL_OK")
</pallas_src>

<mosaic_0001>
module attributes {stable_mosaic.version = 11 : i64} {
  func.func @_rope_kernel(%arg0: i32, %arg1: i32, %arg2: memref<1x8x1xf32, #tpu.memory_space<vmem>>, %arg3: memref<1x1x16xf32, #tpu.memory_space<vmem>>, %arg4: memref<1x8x32xf32, #tpu.memory_space<vmem>>, %arg5: memref<1x8x32xf32, #tpu.memory_space<vmem>>) attributes {dimension_semantics = [#tpu.dimension_semantics<parallel>, #tpu.dimension_semantics<parallel>], iteration_bounds = array<i64: 2, 1>, scalar_prefetch = 0 : i64, scratch_operands = 0 : i64, tpu.core_type = #tpu.core_type<tc>, window_params = [{transform_indices = @transform_0, window_bounds = array<i64: 1, 8, 1>}, {pipeline_mode = #tpu.pipeline_mode<synchronous>, transform_indices = @transform_1, window_bounds = array<i64: 1, 1, 16>}, {transform_indices = @transform_2, window_bounds = array<i64: 1, 8, 32>}, {transform_indices = @transform_3, window_bounds = array<i64: 1, 8, 32>}]} {
    %c0 = arith.constant 0 : index
    %c0_0 = arith.constant 0 : index
    %c0_1 = arith.constant 0 : index
    %0 = vector.load %arg2[%c0, %c0_0, %c0_1] : memref<1x8x1xf32, #tpu.memory_space<vmem>>, vector<1x8x1xf32>
    %c0_2 = arith.constant 0 : index
    %c0_3 = arith.constant 0 : index
    %c0_4 = arith.constant 0 : index
    %1 = vector.load %arg3[%c0_2, %c0_3, %c0_4] : memref<1x1x16xf32, #tpu.memory_space<vmem>>, vector<1x1x16xf32>
    %2 = vector.broadcast %0 : vector<1x8x1xf32> to vector<1x8x16xf32>
    %3 = vector.broadcast %1 : vector<1x1x16xf32> to vector<1x8x16xf32>
    %4 = arith.mulf %2, %3 : vector<1x8x16xf32>
    %5 = math.cos %4 : vector<1x8x16xf32>
    %6 = math.sin %4 : vector<1x8x16xf32>
    %7 = tpu.concatenate %5, %5 in 2 : vector<1x8x16xf32>, vector<1x8x16xf32> -> vector<1x8x32xf32>
    %c0_5 = arith.constant 0 : index
    %c0_6 = arith.constant 0 : index
    %c0_7 = arith.constant 0 : index
    %8 = vector.load %arg4[%c0_5, %c0_6, %c0_7] : memref<1x8x32xf32, #tpu.memory_space<vmem>>, vector<1x8x32xf32>
    tpu.vector_store %arg4[%c0_5, %c0_6, %c0_7], %7 {strides = array<i32>} : memref<1x8x32xf32, #tpu.memory_space<vmem>>, vector<1x8x32xf32>,
    %9 = tpu.concatenate %6, %6 in 2 : vector<1x8x16xf32>, vector<1x8x16xf32> -> vector<1x8x32xf32>
    %c0_8 = arith.constant 0 : index
    %c0_9 = arith.constant 0 : index
    %c0_10 = arith.constant 0 : index
    %10 = vector.load %arg5[%c0_8, %c0_9, %c0_10] : memref<1x8x32xf32, #tpu.memory_space<vmem>>, vector<1x8x32xf32>
    tpu.vector_store %arg5[%c0_8, %c0_9, %c0_10], %9 {strides = array<i32>} : memref<1x8x32xf32, #tpu.memory_space<vmem>>, vector<1x8x32xf32>,
    return
  }
  func.func @transform_0(%arg0: i32, %arg1: i32) -> (i32, i32, i32) {
    %c0_i32 = arith.constant 0 : i32
    %c0_i32_0 = arith.constant 0 : i32
    return %arg0, %arg1, %c0_i32 : i32, i32, i32
  }
  func.func @transform_1(%arg0: i32, %arg1: i32) -> (i32, i32, i32) {
    %c0_i32 = arith.constant 0 : i32
    %c0_i32_0 = arith.constant 0 : i32
    %c0_i32_1 = arith.constant 0 : i32
    %c0_i32_2 = arith.constant 0 : i32
    return %c0_i32, %c0_i32_0, %c0_i32_1 : i32, i32, i32
  }
  func.func @transform_2(%arg0: i32, %arg1: i32) -> (i32, i32, i32) {
    %c0_i32 = arith.constant 0 : i32
    %c0_i32_0 = arith.constant 0 : i32
    return %arg0, %arg1, %c0_i32 : i32, i32, i32
  }
  func.func @transform_3(%arg0: i32, %arg1: i32) -> (i32, i32, i32) {
    %c0_i32 = arith.constant 0 : i32
    %c0_i32_0 = arith.constant 0 : i32
    return %arg0, %arg1, %c0_i32 : i32, i32, i32
  }
}

</mosaic_0001>

<llo_original>
// kernel: tpu_custom_call.1
$region0: #{tpu_custom_call.1}
  #allocation0 [shape = 'u32[]', space=smem, size = 0x4, offset = 0x4, fixed_abs, tag = 'smem constant byte address 0x4 - core index']
  #allocation1 [shape = 'u32[144,128]{1,0:T(1,128)}', space=vmem, size = 0x12000, scoped, tag = 'internal scratch']
  %s0 = inlined_call_operand.vmem [shape: f32[2,8,1], index: 0, kind: input, shape index: {}]
  %s1 = inlined_call_operand.vmem [shape: f32[1,1,16], index: 1, kind: input, shape index: {}]
  %s2 = inlined_call_operand.hbm [shape: f32[2,8,32], index: 2, kind: output, shape index: {0}]
  %s3 = inlined_call_operand.hbm [shape: f32[2,8,32], index: 3, kind: output, shape index: {1}]
  %4 = xla_tuple %s2, %s3
  %s5 = sld [smem:[#allocation0]]
  $region49: #{tpu_custom_call.1} parent=0
    _
  %s7 = ssub.s32 1, %s5
  %s8 = scalar_select 0, %s7, %s5
  $region1: #{tpu_custom_call.1} parent=0
    #allocation2 [shape = 'u8[8192]{0}', space=vmem, size = 0x2000, scoped, tag = 'output window, operand 0']
    #allocation3 [shape = 's32[2]{0}', space=sflag, size = 0x8, scoped, tag = 'scoped memory for tpu_custom_call.1']
    #allocation4 [shape = 'u8[8192]{0}', space=vmem, size = 0x2000, scoped, tag = 'output window, operand 1']
    #allocation5 [shape = 's32[2]{0}', space=sflag, size = 0x8, scoped, tag = 'scoped memory for tpu_custom_call.1']
    %9 = vsyncpa [#allocation3], 0
    %s10 = scalar_lea.sflag [#allocation3], 1
    %11 = vsyncpa %s10, 0
    %12 = vsyncpa [#allocation5], 0
    %s13 = scalar_lea.sflag [#allocation5], 1
    %14 = vsyncpa %s13, 0
    loop: start=0, step=1, limit=4
    $region2: #{tpu_custom_call.1} parent=1 // loop_pre_header
      _
    $region3: #{tpu_custom_call.1} parent=1 // loop_header
      %s16 = sphi 0, %s20
      %p17 = scmp.ge.s32.totalorder %s16, 4
      %s23 = sphi 0, %s35
      %s24 = sphi 0, %s31
      %s25 = sphi 0, %s23
      %s26 = sphi 0, %s24
      %s27 = sphi 0, %s25
      %s28 = sphi 0, %s26
      %s40 = sphi 0, %s42
      %s43 = sphi 0, %s40
      %s44 = sphi 0, %s43
      %s60 = sphi 0, %s44
      %s64 = sphi 0, %s64
      %s66 = sphi 0, %s64
      %s67 = sphi 0, %s66
      %s81 = sphi 0, %s67
      %s89 = sphi 0, %s91
      %s92 = sphi 0, %s89
      %s93 = sphi 0, %s92
      %s109 = sphi 0, %s93
      %s117 = sphi 0, %s119
      %s120 = sphi 0, %s117
      %s121 = sphi 0, %s120
      %s137 = sphi 0, %s121
    $region4: #{tpu_custom_call.1} parent=1 // loop_header_branch
      %19 = sbr.rel (%p17) target = $region8
    $region5: #{tpu_custom_call.1} parent=1 // loop_body
      %s21 = ssub.s32 %s16, 1
      %s22 = ssub.s32 %s16, 2
      %s29 = sadd.s32 1, %s24
      %p30 = scmp.ge.s32.totalorder %s29, 1
      %s31 = scalar_select %p30, 0, %s29
      %s32 = sadd.s32 1, %s23
      %s33 = scalar_select %p30, %s32, %s23
      %p34 = scmp.ge.s32.totalorder %s33, 2
      %s35 = scalar_select %p34, 0, %s33
      %s36 = ssub.s32 %s23, %s35
      %s37 = ssub.s32 %s24, %s31
      %s38 = sor.u32 %s36, %s37
      %p39 = scmp.eq.s32.totalorder %s38, 0
      %s41 = sadd.s32 %s40, 1
      %s42 = scalar_select %p39, %s40, %s41
      %p45 = pneg %p39
      %p46 = scmp.eq.s32.totalorder %s16, 1
      %p47 = por %p45, %p46
      %p48 = scmp.ne.s32.totalorder %s40, %s43
      %p49 = scmp.eq.s32.totalorder %s16, 0
      %p50 = por %p48, %p49
      %p51 = scmp.ne.s32.totalorder %s40, %s43
      %p52 = scmp.eq.s32.totalorder %s21, 1
      %p53 = por %p51, %p52
      %p54 = scmp.ne.s32.totalorder %s43, %s44
      %p55 = scmp.eq.s32.totalorder %s21, 0
      %p56 = por %p54, %p55
      %p57 = scmp.ne.s32.totalorder %s43, %s44
      %p58 = scmp.eq.s32.totalorder %s22, 1
      %p59 = por %p57, %p58
      %p61 = scmp.ne.s32.totalorder %s44, %s60
      %p62 = scmp.eq.s32.totalorder %s22, 0
      %p63 = por %p61, %p62
      %s65 = sadd.s32 %s64, 1
      %p68 = scmp.eq.s32.totalorder %s16, 1
      %p69 = scmp.ne.s32.totalorder %s64, %s66
      %p70 = scmp.eq.s32.totalorder %s16, 0
      %p71 = por %p69, %p70
      %p72 = scmp.ne.s32.totalorder %s64, %s66
      %p73 = scmp.eq.s32.totalorder %s21, 1
      %p74 = por %p72, %p73
      %p75 = scmp.ne.s32.totalorder %s66, %s67
      %p76 = scmp.eq.s32.totalorder %s21, 0
      %p77 = por %p75, %p76
      %p78 = scmp.ne.s32.totalorder %s66, %s67
      %p79 = scmp.eq.s32.totalorder %s22, 1
      %p80 = por %p78, %p79
      %p82 = scmp.ne.s32.totalorder %s67, %s81
      %p83 = scmp.eq.s32.totalorder %s22, 0
      %p84 = por %p82, %p83
      %s85 = ssub.s32 %s23, %s35
      %s86 = ssub.s32 %s24, %s31
      %s87 = sor.u32 %s85, %s86
      %p88 = scmp.eq.s32.totalorder %s87, 0
      %s90 = sadd.s32 %s89, 1
      %s91 = scalar_select %p88, %s89, %s90
      %p94 = pneg %p88
      %p95 = scmp.eq.s32.totalorder %s16, 1
      %p96 = por %p94, %p95
      %p97 = scmp.ne.s32.totalorder %s89, %s92
      %p98 = scmp.eq.s32.totalorder %s16, 0
      %p99 = por %p97, %p98
      %p100 = scmp.ne.s32.totalorder %s89, %s92
      %p101 = scmp.eq.s32.totalorder %s21, 1
      %p102 = por %p100, %p101
      %p103 = scmp.ne.s32.totalorder %s92, %s93
      %p104 = scmp.eq.s32.totalorder %s21, 0
      %p105 = por %p103, %p104
      %p106 = scmp.ne.s32.totalorder %s92, %s93
      %p107 = scmp.eq.s32.totalorder %s22, 1
      %p108 = por %p106, %p107
      %p110 = scmp.ne.s32.totalorder %s93, %s109
      %p111 = scmp.eq.s32.totalorder %s22, 0
      %p112 = por %p110, %p111
      %s113 = ssub.s32 %s23, %s35
      %s114 = ssub.s32 %s24, %s31
      %s115 = sor.u32 %s113, %s114
      %p116 = scmp.eq.s32.totalorder %s115, 0
      %s118 = sadd.s32 %s117, 1
      %s119 = scalar_select %p116, %s117, %s118
      %p122 = pneg %p116
      %p123 = scmp.eq.s32.totalorder %s16, 1
      %p124 = por %p122, %p123
      %p125 = scmp.ne.s32.totalorder %s117, %s120
      %p126 = scmp.eq.s32.totalorder %s16, 0
      %p127 = por %p125, %p126
      %p128 = scmp.ne.s32.totalorder %s117, %s120
      %p129 = scmp.eq.s32.totalorder %s21, 1
      %p130 = por %p128, %p129
      %p131 = scmp.ne.s32.totalorder %s120, %s121
      %p132 = scmp.eq.s32.totalorder %s21, 0
      %p133 = por %p131, %p132
      %p134 = scmp.ne.s32.totalorder %s120, %s121
      %p135 = scmp.eq.s32.totalorder %s22, 1
      %p136 = por %p134, %p135
      %p138 = scmp.ne.s32.totalorder %s121, %s137
      %p139 = scmp.eq.s32.totalorder %s22, 0
      %p140 = por %p138, %p139
      %p141 = scmp.le.s32.totalorder 1, %s16
      %p142 = scmp.lt.s32.totalorder %s16, 3
      %p143 = pnand %p141, %p142
      %p144 = pneg %p143
      // Predicated region
      $region9: #{tpu_custom_call.1} parent=5 // pred_check
        _
      $region10: #{tpu_custom_call.1} parent=5 // pred_check_branch
        %146 = sbr.rel (%p143) target = $region12
      $region11: #{tpu_custom_call.1} parent=5 // pred_region
        %s147 = ssub.s32 %s16, 1
        // Predicated region
        $region13: #{tpu_custom_call.1} parent=11 // pred_check
          %p148 = pneg %p77
        $region14: #{tpu_custom_call.1} parent=11 // pred_check_branch
          %150 = sbr.rel (%p148) target = $region16
        $region15: #{tpu_custom_call.1} parent=11 // pred_region
          _
        $region16: #{tpu_custom_call.1} parent=11 // pred_fallthru
          _
      $region12: #{tpu_custom_call.1} parent=5 // pred_fallthru
        _
      %p151 = scmp.lt.s32.totalorder %s16, 2
      // Predicated region
      $region17: #{tpu_custom_call.1} parent=5 // pred_check
        %p152 = pneg %p151
      $region18: #{tpu_custom_call.1} parent=5 // pred_check_branch
        %154 = sbr.rel (%p152) target = $region20
      $region19: #{tpu_custom_call.1} parent=5 // pred_region
        // Predicated region
        $region21: #{tpu_custom_call.1} parent=19 // pred_check
          %p155 = pneg %p50
        $region22: #{tpu_custom_call.1} parent=19 // pred_check_branch
          %157 = sbr.rel (%p155) target = $region24
        $region23: #{tpu_custom_call.1} parent=19 // pred_region
          %p158 = scmp.lt.s32.totalorder %s23, 1
          %s159 = scalar_select %p158, %s23, 1
          %p160 = scmp.lt.s32.totalorder %s24, 0
          %s161 = scalar_select %p160, %s24, 0
          %s162 = sadd.s32 %s161, %s159
          %s163 = smul.addr %s162, 8
          %s164 = scalar_lea.vmem %s0, %s163
        $region24: #{tpu_custom_call.1} parent=19 // pred_fallthru
          _
      $region20: #{tpu_custom_call.1} parent=5 // pred_fallthru
        _
      %p165 = scmp.le.s32.totalorder 1, %s16
      %p166 = scmp.lt.s32.totalorder %s16, 3
      %p167 = pnand %p165, %p166
      %p168 = pneg %p167
      // Predicated region
      $region25: #{tpu_custom_call.1} parent=5 // pred_check
        _
      $region26: #{tpu_custom_call.1} parent=5 // pred_check_branch
        %170 = sbr.rel (%p167) target = $region28
      $region27: #{tpu_custom_call.1} parent=5 // pred_region
        %s171 = ssub.s32 %s16, 1
        %p172 = scmp.lt.s32.totalorder %s25, 1
        %s173 = scalar_select %p172, %s25, 1
        %p174 = scmp.lt.s32.totalorder %s26, 0
        %s175 = scalar_select %p174, %s26, 0
        %s176 = sadd.s32 %s175, %s173
        %s177 = smul.addr %s176, 8
        %s178 = scalar_lea.vmem %s0, %s177
        %p179 = pneg %p56
        %p180 = pneg %p53
        %p181 = pneg %p77
        %p182 = pneg %p74
        %p183 = pneg %p105
        %p184 = pneg %p102
        %s185 = sand.u32 %s92, 1
        %s186 = scalar_lea.sflag [#allocation3], %s185
        %s187 = sand.u32 %s92, 1
        %s188 = smul.addr %s187, 8
        %s189 = scalar_lea.vmem [#allocation2], %s188
        %p190 = pneg %p133
        %p191 = pneg %p130
        %s192 = sand.u32 %s120, 1
        %s193 = scalar_lea.sflag [#allocation5], %s192
        %s194 = sand.u32 %s120, 1
        %s195 = smul.addr %s194, 8
        %s196 = scalar_lea.vmem [#allocation4], %s195
        %p197 = scmp.lt.s32.totalorder %s25, 1
        %s198 = scalar_select %p197, %s25, 1
        %p199 = scmp.lt.s32.totalorder %s26, 0
        %s200 = scalar_select %p199, %s26, 0
        %s201 = sadd.s32 %s200, %s198
        %s202 = smul.addr %s201, 8
        %s203 = scalar_lea.vmem %s0, %s202
        %v204 = vld [vmem:[%s203] sm:$0xff]
        %v205 = vld [vmem:[%s1] sm:$0x1]
        %207 = vset.pattern.permute.xlu0 0
        %208 = vperm.xlu0 %207, %v204
        %v209 = vpop.permute.xlu0 %208
        %v212 = vlaneseq
        %v213 = vshrl.u32 %v212, 7
        %v214 = vsub.s32 0, %v213
        %v215 = vrot.slane %v205, %v214
        %v217 = vmul.f32 %v209, %v215
        %v218 = vand.u32 2147483647, %v217
        %vm219 = vcmp.le.f32.partialorder %v218, 0.7853982
        %vm220 = vcmp.lt.s32.totalorder %v217, 0
        %v221 = vand.u32 %v217, 2139095040
        %v222 = vshrl.u32 %v221, 23
        %v223 = vsub.s32 %v222, 127
        %v224 = vand.u32 2147483647, %v217
        %v225 = vand.u32 %v224, 8388607
        %v226 = vor.u32 %v225, 8388608
        %v227 = vsub.s32 0, %v226
        %v228 = vadd.s32 %v223, 1
        %vm229 = vcmp.gt.s32.totalorder %v228, 0
        %v230 = vsel %vm229, %v228, 0
        %v231 = vshrl.u32 %v230, 5
        %v232 = vand.u32 %v230, 31
        %v233 = vsub.s32 32, %v232
        %v234 = vshrl.u32 683565275, %v233
        %v235 = vshll.u32 683565275, %v232
        %v236 = vshrl.u32 2475754826, %v233
        %v237 = vor.u32 %v235, %v236
        %v238 = vshll.u32 2475754826, %v232
        %v239 = vshrl.u32 2131351028, %v233
        %v240 = vor.u32 %v238, %v239
        %v241 = vshll.u32 2131351028, %v232
        %v242 = vshrl.u32 2102212464, %v233
        %v243 = vor.u32 %v241, %v242
        %v244 = vshll.u32 2102212464, %v232
        %v245 = vshrl.u32 920167782, %v233
        %v246 = vor.u32 %v244, %v245
        %v247 = vshll.u32 920167782, %v232
        %v248 = vshrl.u32 1326507024, %v233
        %v249 = vor.u32 %v247, %v248
        %vm250 = vcmp.lt.s32.totalorder %v231, 1
        %vm251 = vcmp.lt.s32.totalorder %v231, 2
        %vm252 = vcmp.lt.s32.totalorder %v231, 3
        %vm253 = vcmp.lt.s32.totalorder %v231, 4
        %v254 = vsel %vm250, %v234, %v237
        %v255 = vsel %vm253, %v243, 2102212464
        %v256 = vsel %vm252, %v240, %v255
        %v257 = vsel %vm251, %v254, %v256
        %v258 = vsel %vm250, %v237, %v240
        %v259 = vsel %vm253, %v246, 920167782
        %v260 = vsel %vm252, %v243, %v259
        %v261 = vsel %vm251, %v258, %v260
        %v262 = vsel %vm250, %v240, %v243
        %v263 = vsel %vm253, %v249, 1326507024
        %v264 = vsel %vm252, %v246, %v263
        %v265 = vsel %vm251, %v262, %v264
        %v266 = vshll.u32 %v226, 8
        %v267 = vmul.u32.u64.compose %v266, %v265
        %v268 = vextract.low.u32 %v267
        %v269 = vextract.high.u32 %v267
        %v270 = vmul.u32.u64.compose %v266, %v261
        %v271 = vextract.low.u32 %v270
        %v272 = vextract.high.u32 %v270
        %v273 = vmul.u32 %v266, %v257
        %v274 = vadd.s32 %v269, %v271
        %vm275 = vc.u32 %v269, %v271
        %v276 = vadd.s32 %v272, 1
        %v277 = vsel %vm275, %v276, %v272
        %v278 = vadd.s32 %v273, %v277
        %v279 = vadd.s32 %v278, 536870912
        %v280 = vshrl.u32 %v279, 30
        %v281 = vshll.u32 %v280, 30
        %v282 = vsub.s32 %v278, %v281
        %vm283 = vcmp.lt.s32.totalorder %v282, 0
        %v284 = vsub.s32 0, %v282
        %v285 = vsel %vm283, %v284, %v282
        %v286 = vclz %v285
        %v287 = vsub.s32 %v286, 2
        %vm288 = vcmp.gt.s32.totalorder 0, %v287
        %v289 = vsel %vm288, 0, %v287
        %v290 = vsub.s32 32, %v289
        %v291 = vshll.u32 %v282, %v289
        %v292 = vshrl.u32 %v274, %v290
        %v293 = vor.u32 %v291, %v292
        %v294 = vsub.s32 4294967266, %v289
        %v295 = vadd.s32 %v294, 127
        %v296 = vshll.u32 %v295, 23
        %v297 = vor.u32 4788187, %v296
        %v298 = vand.u32 2147483647, %v297
        %v300 = vcvt.s32.f32 %v293
        %v301 = vmul.f32 %v300, %v298
        %v302 = vxor.u32 %v301, 2147483648
        %v303 = vsel %vm220, %v302, %v301
        %v304 = vsub.s32 4, %v280
        %v305 = vsel %vm220, %v304, %v280
        %v306 = vsel %vm219, %v217, %v303
        %v307 = vsel %vm219, 0, %v305
        %v308 = vcosq.f32.pop %v306
        %v309 = vsinq.f32.pop %v306
        %vm310 = vweird.f32 %v217
        %v311 = vand.u32 %v307, 3
        %vm312 = vcmp.lt.s32.totalorder %v311, 2
        %vm313 = vcmp.eq.s32.totalorder %v311, 0
        %v314 = vxor.u32 %v309, 2147483648
        %v315 = vsel %vm313, %v308, %v314
        %vm316 = vcmp.eq.s32.totalorder %v311, 2
        %v317 = vxor.u32 %v308, 2147483648
        %v318 = vsel %vm316, %v317, %v309
        %v319 = vsel %vm312, %v315, %v318
        %v320 = vsel %vm310, nan, %v319
        %v321 = vand.u32 2147483647, %v217
        %vm322 = vcmp.le.f32.partialorder %v321, 0.7853982
        %vm323 = vcmp.lt.s32.totalorder %v217, 0
        %v324 = vand.u32 %v217, 2139095040
        %v325 = vshrl.u32 %v324, 23
        %v326 = vsub.s32 %v325, 127
        %v327 = vand.u32 2147483647, %v217
        %v328 = vand.u32 %v327, 8388607
        %v329 = vor.u32 %v328, 8388608
        %v330 = vsub.s32 0, %v329
        %v331 = vadd.s32 %v326, 1
        %vm332 = vcmp.gt.s32.totalorder %v331, 0
        %v333 = vsel %vm332, %v331, 0
        %v334 = vshrl.u32 %v333, 5
        %v335 = vand.u32 %v333, 31
        %v336 = vsub.s32 32, %v335
        %v337 = vshrl.u32 683565275, %v336
        %v338 = vshll.u32 683565275, %v335
        %v339 = vshrl.u32 2475754826, %v336
        %v340 = vor.u32 %v338, %v339
        %v341 = vshll.u32 2475754826, %v335
        %v342 = vshrl.u32 2131351028, %v336
        %v343 = vor.u32 %v341, %v342
        %v344 = vshll.u32 2131351028, %v335
        %v345 = vshrl.u32 2102212464, %v336
        %v346 = vor.u32 %v344, %v345
        %v347 = vshll.u32 2102212464, %v335
        %v348 = vshrl.u32 920167782, %v336
        %v349 = vor.u32 %v347, %v348
        %v350 = vshll.u32 920167782, %v335
        %v351 = vshrl.u32 1326507024, %v336
        %v352 = vor.u32 %v350, %v351
        %vm353 = vcmp.lt.s32.totalorder %v334, 1
        %vm354 = vcmp.lt.s32.totalorder %v334, 2
        %vm355 = vcmp.lt.s32.totalorder %v334, 3
        %vm356 = vcmp.lt.s32.totalorder %v334, 4
        %v357 = vsel %vm353, %v337, %v340
        %v358 = vsel %vm356, %v346, 2102212464
        %v359 = vsel %vm355, %v343, %v358
        %v360 = vsel %vm354, %v357, %v359
        %v361 = vsel %vm353, %v340, %v343
        %v362 = vsel %vm356, %v349, 920167782
        %v363 = vsel %vm355, %v346, %v362
        %v364 = vsel %vm354, %v361, %v363
        %v365 = vsel %vm353, %v343, %v346
        %v366 = vsel %vm356, %v352, 1326507024
        %v367 = vsel %vm355, %v349, %v366
        %v368 = vsel %vm354, %v365, %v367
        %v369 = vshll.u32 %v329, 8
        %v370 = vmul.u32.u64.compose %v369, %v368
        %v371 = vextract.low.u32 %v370
        %v372 = vextract.high.u32 %v370
        %v373 = vmul.u32.u64.compose %v369, %v364
        %v374 = vextract.low.u32 %v373
        %v375 = vextract.high.u32 %v373
        %v376 = vmul.u32 %v369, %v360
        %v377 = vadd.s32 %v372, %v374
        %vm378 = vc.u32 %v372, %v374
        %v379 = vadd.s32 %v375, 1
        %v380 = vsel %vm378, %v379, %v375
        %v381 = vadd.s32 %v376, %v380
        %v382 = vadd.s32 %v381, 536870912
        %v383 = vshrl.u32 %v382, 30
        %v384 = vshll.u32 %v383, 30
        %v385 = vsub.s32 %v381, %v384
        %vm386 = vcmp.lt.s32.totalorder %v385, 0
        %v387 = vsub.s32 0, %v385
        %v388 = vsel %vm386, %v387, %v385
        %v389 = vclz %v388
        %v390 = vsub.s32 %v389, 2
        %vm391 = vcmp.gt.s32.totalorder 0, %v390
        %v392 = vsel %vm391, 0, %v390
        %v393 = vsub.s32 32, %v392
        %v394 = vshll.u32 %v385, %v392
        %v395 = vshrl.u32 %v377, %v393
        %v396 = vor.u32 %v394, %v395
        %v397 = vsub.s32 4294967266, %v392
        %v398 = vadd.s32 %v397, 127
        %v399 = vshll.u32 %v398, 23
        %v400 = vor.u32 4788187, %v399
        %v401 = vand.u32 2147483647, %v400
        %v403 = vcvt.s32.f32 %v396
        %v404 = vmul.f32 %v403, %v401
        %v405 = vxor.u32 %v404, 2147483648
        %v406 = vsel %vm323, %v405, %v404
        %v407 = vsub.s32 4, %v383
        %v408 = vsel %vm323, %v407, %v383
        %v409 = vsel %vm322, %v217, %v406
        %v410 = vsel %vm322, 0, %v408
        %v411 = vcosq.f32.pop %v409
        %v412 = vsinq.f32.pop %v409
        %vm413 = vweird.f32 %v217
        %v414 = vadd.s32 %v410, 3
        %v415 = vand.u32 %v414, 3
        %vm416 = vcmp.lt.s32.totalorder %v415, 2
        %vm417 = vcmp.eq.s32.totalorder %v415, 0
        %v418 = vxor.u32 %v412, 2147483648
        %v419 = vsel %vm417, %v411, %v418
        %vm420 = vcmp.eq.s32.totalorder %v415, 2
        %v421 = vxor.u32 %v411, 2147483648
        %v422 = vsel %vm420, %v421, %v412
        %v423 = vsel %vm416, %v419, %v422
        %v424 = vsel %vm413, nan, %v423
        %426 = vrot.lane.b32.xlu0 %v320, 16
        %v427 = vpop.permute.xlu0 %426
        %vm429 = vcmask 130048
        %v430 = vsel %vm429, %v320, %v427
        %vm431 = vcmask 261120
        %432 = vst.msk [vmem:[%s189] sm:$0xff] %vm431, %v430
        %434 = vrot.lane.b32.xlu0 %v424, 16
        %v435 = vpop.permute.xlu0 %434
        %v437 = vsel %vm429, %v424, %v435
        %438 = vst.msk [vmem:[%s196] sm:$0xff] %vm431, %v437
        %s439 = sand.u32 %s92, 1
        %s440 = scalar_lea.sflag [#allocation3], %s439
        %s441 = sand.u32 %s92, 1
        %s442 = smul.addr %s441, 8
        %s443 = scalar_lea.vmem [#allocation2], %s442
        %s444 = sand.u32 %s120, 1
        %s445 = scalar_lea.sflag [#allocation5], %s444
        %s446 = sand.u32 %s120, 1
        %s447 = smul.addr %s446, 8
        %s448 = scalar_lea.vmem [#allocation4], %s447
        // Predicated region
        $region29: #{tpu_custom_call.1} parent=27 // pred_check
          %p449 = pneg %p102
        $region30: #{tpu_custom_call.1} parent=27 // pred_check_branch
          %451 = sbr.rel (%p449) target = $region32
        $region31: #{tpu_custom_call.1} parent=27 // pred_region
          %s453 = ssub.s32 128, 128
          %454 = vsyncadd %s440, %s453
          %s455 = sadd.s32 %s26, %s25
          %s456 = smul.addr %s455, 128
          %s457 = scalar_lea.hbm %s2, %s456
          %s459 = sshll.u32 %s443, 4
          %s460 = int_to_ptr.vmem [resolvable:$true] %s459
          %462 = dma.vmem_to_hbm [thread:$0]  %s460, 128, %s457, %s440
        $region32: #{tpu_custom_call.1} parent=27 // pred_fallthru
          _
        // Predicated region
        $region33: #{tpu_custom_call.1} parent=27 // pred_check
          %p463 = pneg %p130
        $region34: #{tpu_custom_call.1} parent=27 // pred_check_branch
          %465 = sbr.rel (%p463) target = $region36
        $region35: #{tpu_custom_call.1} parent=27 // pred_region
          %s467 = ssub.s32 128, 128
          %468 = vsyncadd %s445, %s467
          %s469 = sadd.s32 %s26, %s25
          %s470 = smul.addr %s469, 128
          %s471 = scalar_lea.hbm %s3, %s470
          %s473 = sshll.u32 %s448, 4
          %s474 = int_to_ptr.vmem [resolvable:$true] %s473
          %476 = dma.vmem_to_hbm [thread:$0]  %s474, 128, %s471, %s445
        $region36: #{tpu_custom_call.1} parent=27 // pred_fallthru
          _
      $region28: #{tpu_custom_call.1} parent=5 // pred_fallthru
        _
      %p477 = scmp.le.s32.totalorder 2, %s16
      // Predicated region
      $region37: #{tpu_custom_call.1} parent=5 // pred_check
        %p478 = pneg %p477
      $region38: #{tpu_custom_call.1} parent=5 // pred_check_branch
        %480 = sbr.rel (%p478) target = $region40
      $region39: #{tpu_custom_call.1} parent=5 // pred_region
        %s481 = ssub.s32 %s16, 2
        // Predicated region
        $region41: #{tpu_custom_call.1} parent=39 // pred_check
          %p482 = pneg %p108
        $region42: #{tpu_custom_call.1} parent=39 // pred_check_branch
          %484 = sbr.rel (%p482) target = $region44
        $region43: #{tpu_custom_call.1} parent=39 // pred_region
          %s485 = sand.u32 %s93, 1
          %s486 = scalar_lea.sflag [#allocation3], %s485
          %s487 = sand.u32 %s93, 1
          %s488 = smul.addr %s487, 8
          %s489 = scalar_lea.vmem [#allocation2], %s488
          %490 = dma.done %s486, 128
        $region44: #{tpu_custom_call.1} parent=39 // pred_fallthru
          _
        // Predicated region
        $region45: #{tpu_custom_call.1} parent=39 // pred_check
          %p491 = pneg %p136
        $region46: #{tpu_custom_call.1} parent=39 // pred_check_branch
          %493 = sbr.rel (%p491) target = $region48
        $region47: #{tpu_custom_call.1} parent=39 // pred_region
          %s494 = sand.u32 %s121, 1
          %s495 = scalar_lea.sflag [#allocation5], %s494
          %s496 = sand.u32 %s121, 1
          %s497 = smul.addr %s496, 8
          %s498 = scalar_lea.vmem [#allocation4], %s497
          %499 = dma.done %s495, 128
        $region48: #{tpu_custom_call.1} parent=39 // pred_fallthru
          _
      $region40: #{tpu_custom_call.1} parent=5 // pred_fallthru
        _
    $region6: #{tpu_custom_call.1} parent=1 // loop_footer
      %s20 = sadd.s32 1, %s16
    $region7: #{tpu_custom_call.1} parent=1 // loop_footer_branch
      %15 = sbr.rel target = $region3
    $region8: #{tpu_custom_call.1} parent=1 // loop_exit
      _
    %500 = vsyncpa [#allocation3], 1
    %s501 = scalar_lea.sflag [#allocation3], 1
    %502 = vsyncpa %s501, 1
    %503 = vsyncpa [#allocation5], 1
    %s504 = scalar_lea.sflag [#allocation5], 1
    %505 = vsyncpa %s504, 1

</llo_original>
